<compile_context>
chip_gen: v6e
topology: v6e:2x2x1
jax: 0.10.0
libtpu: 0.0.40
codegen_flags: <defaults>
</compile_context>

<pallas_src>
import math

import jax
import jax.numpy as jnp
from jax.experimental import pallas as pl
from jax.experimental.pallas import tpu as pltpu


# ---------------------------------------------------------------------------
# Kernels
# ---------------------------------------------------------------------------

def _addbias_rows_kernel(x_ref, b_ref, o_ref):
    # x_ref: (TB, L), b_ref: (1, L) -> broadcast bias over rows.
    o_ref[...] = (x_ref[...] + b_ref[...]).astype(o_ref.dtype)


def _addbias_nchw_kernel(x_ref, b_ref, o_ref):
    # x_ref: (1, TC, THW), b_ref: (1, TC, 1) -> broadcast bias over spatial.
    o_ref[...] = (x_ref[...] + b_ref[...]).astype(o_ref.dtype)


# ---------------------------------------------------------------------------
# Tiling helpers
# ---------------------------------------------------------------------------

_TARGET_BLOCK_BYTES = 2 * 1024 * 1024   # ~2 MiB per block; double-buffered
                                        # in+out stays well under scoped VMEM
                                        # on every generation incl. v7x.
_THW_MAX = 2048                         # lane tile cap (multiple of 128)
_TC_MAX = 256                           # sublane tile cap (multiple of 8)


def _pick_rows(num_rows, row_bytes):
    """Pick a sublane (row) tile: full array, or a multiple of 8."""
    tb = max(1, _TARGET_BLOCK_BYTES // max(row_bytes, 1))
    if tb >= num_rows:
        return num_rows
    return min(num_rows, max(8, (tb // 8) * 8))


# ---------------------------------------------------------------------------
# Wrapper module
# ---------------------------------------------------------------------------

class AddBias:
    """JAX/Pallas equivalent of the PyTorch AddBias module."""

    def __init__(self, bias):
        # PyTorch: self._bias = nn.Parameter(bias.unsqueeze(1)) -> shape (C, 1)
        self._bias = jnp.asarray(bias).reshape(-1, 1)
        self._bias_cache = {}   # (role, dtype, extra) -> precomputed bias array

    # -- cached bias views ---------------------------------------------------

    def _bias_row(self, dtype, repeat):
        key = ("row", jnp.dtype(dtype).name, repeat)
        if key not in self._bias_cache:
            row = self._bias.reshape(1, -1).astype(dtype)
            if repeat > 1:
                row = jnp.tile(row, (1, repeat))
            self._bias_cache[key] = row
        return self._bias_cache[key]

    def _bias_chan(self, dtype):
        key = ("chan", jnp.dtype(dtype).name, 1)
        if key not in self._bias_cache:
            self._bias_cache[key] = self._bias.reshape(1, -1, 1).astype(dtype)
        return self._bias_cache[key]

    # -- forward -------------------------------------------------------------

    def __call__(self, x):
        C = self._bias.shape[0]
        out_dtype = jnp.result_type(x.dtype, self._bias.dtype)

        if x.ndim == 2:
            B = x.shape[0]
            assert x.shape[1] == C

            # Lane-density fix: pack G consecutive rows into the lane axis when
            # C is not a multiple of 128 and B allows it (pure view, no copy).
            g = 1
            if C % 128 != 0:
                g0 = 128 // math.gcd(C, 128)
                if g0 > 1 and B % g0 == 0:
                    g = g0
            Bv, L = B // g, C * g
            xv = x.reshape(Bv, L)
            bias_row = self._bias_row(out_dtype, g)                 # (1, L)

            itemsize = jnp.dtype(out_dtype).itemsize
            tb = _pick_rows(Bv, L * itemsize)
            grid = (pl.cdiv(Bv, tb),)

            out = pl.pallas_call(
                _addbias_rows_kernel,
                out_shape=jax.ShapeDtypeStruct((Bv, L), out_dtype),
                grid_spec=pltpu.PrefetchScalarGridSpec(
                    num_scalar_prefetch=0,
                    grid=grid,
                    in_specs=[
                        pl.BlockSpec((tb, L), lambda i: (i, 0)),
                        pl.BlockSpec((1, L), lambda i: (0, 0)),
                    ],
                    out_specs=pl.BlockSpec((tb, L), lambda i: (i, 0)),
                ),
                compiler_params=pltpu.CompilerParams(
                    dimension_semantics=("parallel",)
                ),
            )(xv, bias_row)
            return out.reshape(B, C)

        elif x.ndim == 4:
            N, Cx, H, W = x.shape
            assert Cx == C
            HW = H * W
            x3 = x.reshape(N, C, HW)                                # (N, C, H*W)
            bias3 = self._bias_chan(out_dtype)                      # (1, C, 1)

            # Tile sizes: lane axis in multiples of 128 (or full HW), sublane
            # (channel) axis in multiples of 8 (or full C). ~<=2 MiB blocks.
            thw = HW if HW <= _THW_MAX else (_THW_MAX // 128) * 128
            tc = C if C <= _TC_MAX else (_TC_MAX // 8) * 8
            grid = (N, pl.cdiv(C, tc), pl.cdiv(HW, thw))

            out3 = pl.pallas_call(
                _addbias_nchw_kernel,
                out_shape=jax.ShapeDtypeStruct((N, C, HW), out_dtype),
                grid_spec=pltpu.PrefetchScalarGridSpec(
                    num_scalar_prefetch=0,
                    grid=grid,
                    in_specs=[
                        pl.BlockSpec((1, tc, thw),
                                     lambda n, ci, hi: (n, ci, hi)),
                        pl.BlockSpec((1, tc, 1),
                                     lambda n, ci, hi: (0, ci, 0)),
                    ],
                    out_specs=pl.BlockSpec((1, tc, thw),
                                           lambda n, ci, hi: (n, ci, hi)),
                ),
                compiler_params=pltpu.CompilerParams(
                    dimension_semantics=("parallel", "parallel", "parallel")
                ),
            )(x3, bias3)
            return out3.reshape(N, C, H, W)

        else:
            raise ValueError(
                f"AddBias expects 2D or 4D input, got ndim={x.ndim}")


# ---------------------------------------------------------------------------
# Main
# ---------------------------------------------------------------------------

if __name__ == "__main__":
    key = jax.random.PRNGKey(0)
    k_bias, k_x2, k_x4 = jax.random.split(key, 3)

    C = 4
    bias = jax.random.normal(k_bias, (C,), dtype=jnp.float32)
    module = AddBias(bias)

    # 2D case: (B, C)
    B = 2
    x2 = jax.random.normal(k_x2, (B, C), dtype=jnp.float32)
    y2 = jax.block_until_ready(module(x2))
    ref2 = x2 + bias.reshape(1, C)
    assert y2.shape == ref2.shape and y2.dtype == ref2.dtype
    assert jnp.allclose(y2, ref2, atol=1e-6), "2D AddBias mismatch"

    # 4D case: NCHW (N, C, H, W)
    N, H, W = 2, 16, 16
    x4 = jax.random.normal(k_x4, (N, C, H, W), dtype=jnp.float32)
    y4 = jax.block_until_ready(module(x4))
    ref4 = x4 + bias.reshape(1, C, 1, 1)
    assert y4.shape == ref4.shape and y4.dtype == ref4.dtype
    assert jnp.allclose(y4, ref4, atol=1e-6), "4D AddBias mismatch"

    print("KERNEL_OK")
</pallas_src>

<mosaic_0001>
module attributes {stable_mosaic.version = 11 : i64} {
  func.func @_addbias_rows_kernel(%arg0: i32, %arg1: memref<2x4xf32, #tpu.memory_space<vmem>>, %arg2: memref<1x4xf32, #tpu.memory_space<vmem>>, %arg3: memref<2x4xf32, #tpu.memory_space<vmem>>) attributes {dimension_semantics = [#tpu.dimension_semantics<parallel>], iteration_bounds = array<i64: 1>, scalar_prefetch = 0 : i64, scratch_operands = 0 : i64, tpu.core_type = #tpu.core_type<tc>, window_params = [{transform_indices = @transform_0, window_bounds = array<i64: 2, 4>}, {pipeline_mode = #tpu.pipeline_mode<synchronous>, transform_indices = @transform_1, window_bounds = array<i64: 1, 4>}, {transform_indices = @transform_2, window_bounds = array<i64: 2, 4>}]} {
    %c0 = arith.constant 0 : index
    %c0_0 = arith.constant 0 : index
    %0 = vector.load %arg1[%c0, %c0_0] : memref<2x4xf32, #tpu.memory_space<vmem>>, vector<2x4xf32>
    %c0_1 = arith.constant 0 : index
    %c0_2 = arith.constant 0 : index
    %1 = vector.load %arg2[%c0_1, %c0_2] : memref<1x4xf32, #tpu.memory_space<vmem>>, vector<1x4xf32>
    %2 = vector.broadcast %1 : vector<1x4xf32> to vector<2x4xf32>
    %3 = arith.addf %0, %2 : vector<2x4xf32>
    %c0_3 = arith.constant 0 : index
    %c0_4 = arith.constant 0 : index
    %4 = vector.load %arg3[%c0_3, %c0_4] : memref<2x4xf32, #tpu.memory_space<vmem>>, vector<2x4xf32>
    tpu.vector_store %arg3[%c0_3, %c0_4], %3 {strides = array<i32>} : memref<2x4xf32, #tpu.memory_space<vmem>>, vector<2x4xf32>,
    return
  }
  func.func @transform_0(%arg0: i32) -> (i32, i32) {
    %c0_i32 = arith.constant 0 : i32
    %c0_i32_0 = arith.constant 0 : i32
    return %arg0, %c0_i32 : i32, i32
  }
  func.func @transform_1(%arg0: i32) -> (i32, i32) {
    %c0_i32 = arith.constant 0 : i32
    %c0_i32_0 = arith.constant 0 : i32
    %c0_i32_1 = arith.constant 0 : i32
    return %c0_i32, %c0_i32_0 : i32, i32
  }
  func.func @transform_2(%arg0: i32) -> (i32, i32) {
    %c0_i32 = arith.constant 0 : i32
    %c0_i32_0 = arith.constant 0 : i32
    return %arg0, %c0_i32 : i32, i32
  }
}

</mosaic_0001>

<llo_original>
// kernel: tpu_custom_call.1
$region0: #{tpu_custom_call.1}
  #allocation0 [shape = 'u32[]', space=smem, size = 0x4, offset = 0x4, fixed_abs, tag = 'smem constant byte address 0x4 - core index']
  #allocation1 [shape = 'u32[144,128]{1,0:T(1,128)}', space=vmem, size = 0x12000, scoped, tag = 'internal scratch']
  %s0 = inlined_call_operand.hbm [shape: f32[2,4], index: 0, kind: input, shape index: {}]
  %s1 = inlined_call_operand.vmem [shape: f32[1,4], index: 1, kind: input, shape index: {}]
  %s2 = inlined_call_operand.hbm [shape: f32[2,4], index: 2, kind: output, shape index: {}]
  %s3 = sld [smem:[#allocation0]]
  $region22: #{tpu_custom_call.1} parent=0
    _
  %s5 = ssub.s32 1, %s3
  %s6 = scalar_select 0, %s5, %s3
  $region1: #{tpu_custom_call.1} parent=0
    #allocation2 [shape = 'u8[1024]{0}', space=vmem, size = 0x400, scoped, tag = 'input window, operand 0, single buffered']
    #allocation3 [shape = 's32[1]{0}', space=sflag, size = 0x4, scoped, tag = 'scoped memory for tpu_custom_call.1']
    #allocation4 [shape = 's32[1]{0}', space=sflag, size = 0x4, scoped, tag = 'scoped memory for tpu_custom_call.1']
    #allocation5 [shape = 'u8[1024]{0}', space=vmem, size = 0x400, scoped, tag = 'output window, operand 0, single buffered']
    %7 = vsyncpa [#allocation3], 0
    %8 = vsyncpa [#allocation4], 0
    // Predicated region
    $region2: #{tpu_custom_call.1} parent=1 // pred_check
      _
    $region3: #{tpu_custom_call.1} parent=1 // pred_check_branch
      %10 = sbr.rel (0) target = $region5
    $region4: #{tpu_custom_call.1} parent=1 // pred_region
      %s12 = ssub.s32 32, 32
      %13 = vsyncadd [#allocation3], %s12
      %s15 = sshll.u32 [#allocation2], 4
      %s16 = int_to_ptr.vmem [resolvable:$true] %s15
      %18 = dma.hbm_to_vmem [thread:$0]  %s0, 32, %s16, [#allocation3]
    $region5: #{tpu_custom_call.1} parent=1 // pred_fallthru
      _
    // Predicated region
    $region6: #{tpu_custom_call.1} parent=1 // pred_check
      _
    $region7: #{tpu_custom_call.1} parent=1 // pred_check_branch
      %20 = sbr.rel (0) target = $region9
    $region8: #{tpu_custom_call.1} parent=1 // pred_region
      _
    $region9: #{tpu_custom_call.1} parent=1 // pred_fallthru
      _
    // Predicated region
    $region10: #{tpu_custom_call.1} parent=1 // pred_check
      _
    $region11: #{tpu_custom_call.1} parent=1 // pred_check_branch
      %22 = sbr.rel (0) target = $region13
    $region12: #{tpu_custom_call.1} parent=1 // pred_region
      %23 = dma.done [#allocation3], 32
    $region13: #{tpu_custom_call.1} parent=1 // pred_fallthru
      _
    %v24 = vld [vmem:[#allocation2] sm:$0x3]
    %v25 = vld [vmem:[%s1] sm:$0x1]
    %v27 = vlaneseq
    %v28 = vshrl.u32 %v27, 7
    %v29 = vsub.s32 0, %v28
    %v30 = vrot.slane %v25, %v29
    %v32 = vadd.f32 %v24, %v30
    %vm33 = vcmask 25600
    %34 = vst.msk [vmem:[#allocation5] sm:$0x3] %vm33, %v32
    // Predicated region
    $region14: #{tpu_custom_call.1} parent=1 // pred_check
      _
    $region15: #{tpu_custom_call.1} parent=1 // pred_check_branch
      %36 = sbr.rel (0) target = $region17
    $region16: #{tpu_custom_call.1} parent=1 // pred_region
      %s38 = ssub.s32 32, 32
      %39 = vsyncadd [#allocation4], %s38
      %s41 = sshll.u32 [#allocation5], 4
      %s42 = int_to_ptr.vmem [resolvable:$true] %s41
      %44 = dma.vmem_to_hbm [thread:$0]  %s42, 32, %s2, [#allocation4]
    $region17: #{tpu_custom_call.1} parent=1 // pred_fallthru
      _
    // Predicated region
    $region18: #{tpu_custom_call.1} parent=1 // pred_check
      _
    $region19: #{tpu_custom_call.1} parent=1 // pred_check_branch
      %46 = sbr.rel (0) target = $region21
    $region20: #{tpu_custom_call.1} parent=1 // pred_region
      %47 = dma.done [#allocation4], 32
    $region21: #{tpu_custom_call.1} parent=1 // pred_fallthru
      _
    %48 = vsyncpa [#allocation3], 1
    %49 = vsyncpa [#allocation4], 1

</llo_original>
